<compile_context>
chip_gen: v6e
topology: v6e:2x2x1
jax: 0.10.0
libtpu: 0.0.40
codegen_flags: <defaults>
</compile_context>

<pallas_src>
import numpy as np
import jax
import jax.numpy as jnp
from jax.experimental import pallas as pl
from jax.experimental.pallas import tpu as pltpu


def _round_up(x, m):
    return ((x + m - 1) // m) * m


def _mlm_loss_kernel(x_ref, wt_ref, b_ref, lab_ref, sum_ref, cnt_ref,
                     sum_rows, cnt_rows):
    """One grid step: a (tm, dim) tile of positions -> partial CE sum & count.

    x_ref    : (tm, dim)   bf16  activations
    wt_ref   : (dim, NT)   bf16  transposed Linear weight, vocab padded to NT
    b_ref    : (1, NT)     f32   bias, padded columns = -1e9
    lab_ref  : (tm, 1)     int32 labels, -1 == position not selected by mask
    sum_ref  : (1, 1, 1)   f32   per-core CE sum      (written at last step)
    cnt_ref  : (1, 1, 1)   f32   per-core mask count  (written at last step)
    sum_rows : (tm, 1)     f32   VMEM row accumulator (persists across steps)
    cnt_rows : (tm, 1)     f32   VMEM row accumulator (persists across steps)
    """
    s = pl.program_id(1)

    @pl.when(s == 0)
    def _():
        sum_rows[...] = jnp.zeros_like(sum_rows)
        cnt_rows[...] = jnp.zeros_like(cnt_rows)

    # bf16 MXU matmul with f32 accumulation; everything after stays f32.
    logits = jnp.dot(x_ref[...], wt_ref[...],
                     preferred_element_type=jnp.float32)
    logits = logits + b_ref[...]                                    # (tm, NT)

    # Numerically stable log-sum-exp over the lane-dense vocab axis.
    m = jnp.max(logits, axis=-1, keepdims=True)                     # (tm, 1)
    lse = m + jnp.log(jnp.sum(jnp.exp(logits - m), axis=-1, keepdims=True))

    # logits[row, label[row]] via iota compare (no dynamic gather on TPU).
    lab = lab_ref[...]                                              # (tm, 1)
    col = jax.lax.broadcasted_iota(jnp.int32, logits.shape, 1)
    label_logit = jnp.sum(jnp.where(col == lab, logits, 0.0),
                          axis=-1, keepdims=True)                   # (tm, 1)

    msk = (lab >= 0).astype(jnp.float32)                            # (tm, 1)

    # Per-row accumulation: pure VPU adds, no per-step cross-sublane reduce.
    sum_rows[...] += (lse - label_logit) * msk
    cnt_rows[...] += msk

    @pl.when(s == pl.num_programs(1) - 1)
    def _():
        sum_ref[...] = jnp.sum(sum_rows[...]).reshape(1, 1, 1)
        cnt_ref[...] = jnp.sum(cnt_rows[...]).reshape(1, 1, 1)


def mlm_forward_loss(seq_embed, original_seq, mask, weight, bias):
    """Pallas equivalent of MLM.forward(seq_embed, original_seq, mask).

    Returns NaN if no position is masked (matches F.cross_entropy on an empty
    selection).
    """
    dim = seq_embed.shape[-1]
    num_tokens = weight.shape[0]
    M = int(np.prod(seq_embed.shape[:-1]))

    # One 128-lane vocab tile.
    NT = max(128, _round_up(num_tokens, 128))

    # Two-way "parallel" split so both v7x TensorCores are used; harmless on
    # single-core v5e/v6e chips.
    NC = 2 if M >= 16 else 1

    # Position tile: as large as a v7x-safe VMEM budget allows (pipelined bf16
    # activations + f32 logits temporaries), no wider than the per-core work.
    tm = 1024
    while tm > 128 and (3 * tm * dim * 2 + 6 * tm * NT * 4) > (16 << 20):
        tm //= 2
    tm = max(8, min(tm, _round_up(-(-M // NC), 8)))

    steps = -(-M // (NC * tm))            # ceil-div
    M_pad = NC * tm * steps

    # bf16 operands for the MXU; bias (and the -1e9 vocab padding) stays f32.
    wt = jnp.zeros((dim, NT), jnp.bfloat16).at[:, :num_tokens].set(
        jnp.asarray(weight).astype(jnp.bfloat16).T)
    bp = jnp.full((1, NT), -1e9, jnp.float32).at[0, :num_tokens].set(
        jnp.asarray(bias, jnp.float32))

    x = jnp.asarray(seq_embed).astype(jnp.bfloat16).reshape(M, dim)
    lab = jnp.where(jnp.asarray(mask, jnp.bool_),
                    jnp.asarray(original_seq, jnp.int32), -1).reshape(M, 1)

    if M_pad != M:                        # padded rows contribute 0 (label == -1)
        x = jnp.pad(x, ((0, M_pad - M), (0, 0)))
        lab = jnp.pad(lab, ((0, M_pad - M), (0, 0)), constant_values=-1)

    vmem_est = (3 * tm * dim * 2          # pipelined bf16 activation buffers
                + dim * NT * 2 + NT * 4   # resident W^T / bias
                + 4 * tm * 128 * 4        # label buffers + row accumulators
                + 6 * tm * NT * 4)        # f32 logits + softmax temporaries
    vmem_limit = int(min(max(2 * vmem_est, 16 << 20), 48 << 20))

    sum_out, cnt_out = pl.pallas_call(
        _mlm_loss_kernel,
        out_shape=(jax.ShapeDtypeStruct((NC, 1, 1), jnp.float32),
                   jax.ShapeDtypeStruct((NC, 1, 1), jnp.float32)),
        grid_spec=pltpu.PrefetchScalarGridSpec(
            num_scalar_prefetch=0,
            grid=(NC, steps),
            in_specs=[
                pl.BlockSpec((tm, dim), lambda c, s: (c * steps + s, 0)),
                pl.BlockSpec((dim, NT), lambda c, s: (0, 0)),   # W^T (resident)
                pl.BlockSpec((1, NT), lambda c, s: (0, 0)),     # bias (resident)
                pl.BlockSpec((tm, 1), lambda c, s: (c * steps + s, 0)),
            ],
            out_specs=[pl.BlockSpec((1, 1, 1), lambda c, s: (c, 0, 0)),
                       pl.BlockSpec((1, 1, 1), lambda c, s: (c, 0, 0))],
            scratch_shapes=[pltpu.VMEM((tm, 1), jnp.float32),
                            pltpu.VMEM((tm, 1), jnp.float32)],
        ),
        compiler_params=pltpu.CompilerParams(
            dimension_semantics=("parallel", "arbitrary"),
            vmem_limit_bytes=vmem_limit),
    )(x, wt, bp, lab)

    return jnp.sum(sum_out) / jnp.sum(cnt_out)


def _reference_loss(x_flat, original_seq, mask, weight, bias):
    """NumPy port of the PyTorch forward, for verification."""
    logits = x_flat @ np.asarray(weight, np.float32).T + np.asarray(bias, np.float32)
    m_flat = np.asarray(mask).reshape(-1).astype(bool)
    lab = np.asarray(original_seq).reshape(-1)[m_flat]
    sel = logits[m_flat]
    mx = sel.max(axis=-1, keepdims=True)
    lse = (mx + np.log(np.exp(sel - mx).sum(axis=-1, keepdims=True)))[:, 0]
    ce = lse - sel[np.arange(sel.shape[0]), lab]
    return ce.mean()


if __name__ == "__main__":
    key = jax.random.PRNGKey(0)
    k1, k2, k3, k4, k5 = jax.random.split(key, 5)

    # Small shapes consistent with the module: (batch, num_msa, seq_len, dim).
    B, N, L, dim = 2, 4, 16, 32
    num_tokens = 21        # amino-acid vocabulary size

    seq_embed = jax.random.normal(k1, (B, N, L, dim), jnp.float32)
    original_seq = jax.random.randint(k2, (B, N, L), 0, num_tokens, jnp.int32)
    mask = jax.random.bernoulli(k3, 0.5, (B, N, L))
    mask = mask.at[0, 0, 0].set(True)      # ensure at least one masked position

    # Deterministic Linear(dim, num_tokens) parameters.
    weight = jax.random.normal(k4, (num_tokens, dim), jnp.float32) / np.sqrt(dim)
    bias = 0.01 * jax.random.normal(k5, (num_tokens,), jnp.float32)

    loss = mlm_forward_loss(seq_embed, original_seq, mask, weight, bias)
    loss = jax.block_until_ready(loss)

    # Reference uses the same bf16-rounded operands the kernel feeds the MXU,
    # so the comparison only measures kernel math (not the deliberate bf16 cast).
    x_r = np.asarray(seq_embed.astype(jnp.bfloat16).astype(jnp.float32)).reshape(-1, dim)
    w_r = np.asarray(jnp.asarray(weight).astype(jnp.bfloat16).astype(jnp.float32))
    ref = _reference_loss(x_r, original_seq, mask, w_r, bias)
    np.testing.assert_allclose(np.asarray(loss), float(ref), rtol=2e-3, atol=2e-3)

    print("KERNEL_OK")
</pallas_src>

<mosaic_0001>
module attributes {stable_mosaic.version = 11 : i64} {
  func.func @_mlm_loss_kernel(%arg0: i32, %arg1: i32, %arg2: memref<64x32xbf16, #tpu.memory_space<vmem>>, %arg3: memref<32x128xbf16, #tpu.memory_space<vmem>>, %arg4: memref<1x128xf32, #tpu.memory_space<vmem>>, %arg5: memref<64x1xi32, #tpu.memory_space<vmem>>, %arg6: memref<1x1x1xf32, #tpu.memory_space<vmem>>, %arg7: memref<1x1x1xf32, #tpu.memory_space<vmem>>, %arg8: memref<64x1xf32, #tpu.memory_space<vmem>>, %arg9: memref<64x1xf32, #tpu.memory_space<vmem>>) attributes {dimension_semantics = [#tpu.dimension_semantics<parallel>, #tpu.dimension_semantics<arbitrary>], iteration_bounds = array<i64: 2, 1>, scalar_prefetch = 0 : i64, scratch_operands = 2 : i64, tpu.core_type = #tpu.core_type<tc>, window_params = [{transform_indices = @transform_0, window_bounds = array<i64: 64, 32>}, {pipeline_mode = #tpu.pipeline_mode<synchronous>, transform_indices = @transform_1, window_bounds = array<i64: 32, 128>}, {pipeline_mode = #tpu.pipeline_mode<synchronous>, transform_indices = @transform_2, window_bounds = array<i64: 1, 128>}, {transform_indices = @transform_3, window_bounds = array<i64: 64, 1>}, {transform_indices = @transform_4, window_bounds = array<i64: 1, 1, 1>}, {transform_indices = @transform_5, window_bounds = array<i64: 1, 1, 1>}]} {
    %c0_i32 = arith.constant 0 : i32
    %0 = arith.cmpi eq, %arg1, %c0_i32 : i32
    %1 = arith.extui %0 : i1 to i32
    %c0_i32_0 = arith.constant 0 : i32
    %2 = arith.cmpi ne, %1, %c0_i32_0 : i32
    scf.if %2 {
      %cst_23 = arith.constant 0.000000e+00 : f32
      %41 = vector.broadcast %cst_23 : f32 to vector<64x1xf32>
      %c0_24 = arith.constant 0 : index
      %c0_25 = arith.constant 0 : index
      %42 = vector.load %arg8[%c0_24, %c0_25] : memref<64x1xf32, #tpu.memory_space<vmem>>, vector<64x1xf32>
      tpu.vector_store %arg8[%c0_24, %c0_25], %41 {strides = array<i32>} : memref<64x1xf32, #tpu.memory_space<vmem>>, vector<64x1xf32>,
      %cst_26 = arith.constant 0.000000e+00 : f32
      %43 = vector.broadcast %cst_26 : f32 to vector<64x1xf32>
      %c0_27 = arith.constant 0 : index
      %c0_28 = arith.constant 0 : index
      %44 = vector.load %arg9[%c0_27, %c0_28] : memref<64x1xf32, #tpu.memory_space<vmem>>, vector<64x1xf32>
      tpu.vector_store %arg9[%c0_27, %c0_28], %43 {strides = array<i32>} : memref<64x1xf32, #tpu.memory_space<vmem>>, vector<64x1xf32>,
    } else {
    }
    %c0 = arith.constant 0 : index
    %c0_1 = arith.constant 0 : index
    %3 = vector.load %arg2[%c0, %c0_1] : memref<64x32xbf16, #tpu.memory_space<vmem>>, vector<64x32xbf16>
    %c0_2 = arith.constant 0 : index
    %c0_3 = arith.constant 0 : index
    %4 = vector.load %arg3[%c0_2, %c0_3] : memref<32x128xbf16, #tpu.memory_space<vmem>>, vector<32x128xbf16>
    %cst = arith.constant dense<0.000000e+00> : vector<64x128xf32>
    %5 = tpu.matmul %3, %4, %cst {dimension_numbers = #tpu.dot_dimension_numbers<[1], [0], [0], [1], [0, 0, 1, 1], [], []>} : vector<64x32xbf16>, vector<32x128xbf16>, vector<64x128xf32> -> vector<64x128xf32>
    %c0_4 = arith.constant 0 : index
    %c0_5 = arith.constant 0 : index
    %6 = vector.load %arg4[%c0_4, %c0_5] : memref<1x128xf32, #tpu.memory_space<vmem>>, vector<1x128xf32>
    %7 = vector.broadcast %6 : vector<1x128xf32> to vector<64x128xf32>
    %8 = arith.addf %5, %7 : vector<64x128xf32>
    %cst_6 = arith.constant dense<0xFF800000> : vector<64xf32>
    %9 = vector.multi_reduction <maximumf>, %8, %cst_6 [1] : vector<64x128xf32> to vector<64xf32>
    %10 = vector.shape_cast %9 : vector<64xf32> to vector<64x1xf32>
    %11 = vector.broadcast %10 : vector<64x1xf32> to vector<64x128xf32>
    %12 = arith.subf %8, %11 : vector<64x128xf32>
    %13 = math.exp %12 : vector<64x128xf32>
    %cst_7 = arith.constant dense<0.000000e+00> : vector<64xf32>
    %14 = vector.multi_reduction <add>, %13, %cst_7 [1] : vector<64x128xf32> to vector<64xf32>
    %15 = vector.shape_cast %14 : vector<64xf32> to vector<64x1xf32>
    %16 = math.log %15 : vector<64x1xf32>
    %17 = arith.addf %10, %16 : vector<64x1xf32>
    %c0_8 = arith.constant 0 : index
    %c0_9 = arith.constant 0 : index
    %18 = vector.load %arg5[%c0_8, %c0_9] : memref<64x1xi32, #tpu.memory_space<vmem>>, vector<64x1xi32>
    %19 = tpu.iota {dimensions = array<i32: 1>} : vector<64x128xi32>
    %20 = vector.broadcast %18 : vector<64x1xi32> to vector<64x128xi32>
    %21 = arith.cmpi eq, %19, %20 : vector<64x128xi32>
    %cst_10 = arith.constant 0.000000e+00 : f32
    %22 = vector.broadcast %cst_10 : f32 to vector<64x128xf32>
    %23 = arith.select %21, %8, %22 : vector<64x128xi1>, vector<64x128xf32>
    %cst_11 = arith.constant dense<0.000000e+00> : vector<64xf32>
    %24 = vector.multi_reduction <add>, %23, %cst_11 [1] : vector<64x128xf32> to vector<64xf32>
    %25 = vector.shape_cast %24 : vector<64xf32> to vector<64x1xf32>
    %c0_i32_12 = arith.constant 0 : i32
    %26 = vector.broadcast %c0_i32_12 : i32 to vector<64x1xi32>
    %27 = arith.cmpi sge, %18, %26 : vector<64x1xi32>
    %28 = arith.extui %27 : vector<64x1xi1> to vector<64x1xi32>
    %29 = arith.sitofp %28 : vector<64x1xi32> to vector<64x1xf32>
    %c0_13 = arith.constant 0 : index
    %c0_14 = arith.constant 0 : index
    %30 = vector.load %arg8[%c0_13, %c0_14] : memref<64x1xf32, #tpu.memory_space<vmem>>, vector<64x1xf32>
    %31 = arith.subf %17, %25 : vector<64x1xf32>
    %32 = arith.mulf %31, %29 : vector<64x1xf32>
    %33 = arith.addf %30, %32 : vector<64x1xf32>
    %c0_15 = arith.constant 0 : index
    %c0_16 = arith.constant 0 : index
    %34 = vector.load %arg8[%c0_15, %c0_16] : memref<64x1xf32, #tpu.memory_space<vmem>>, vector<64x1xf32>
    tpu.vector_store %arg8[%c0_15, %c0_16], %33 {strides = array<i32>} : memref<64x1xf32, #tpu.memory_space<vmem>>, vector<64x1xf32>,
    %c0_17 = arith.constant 0 : index
    %c0_18 = arith.constant 0 : index
    %35 = vector.load %arg9[%c0_17, %c0_18] : memref<64x1xf32, #tpu.memory_space<vmem>>, vector<64x1xf32>
    %36 = arith.addf %35, %29 : vector<64x1xf32>
    %c0_19 = arith.constant 0 : index
    %c0_20 = arith.constant 0 : index
    %37 = vector.load %arg9[%c0_19, %c0_20] : memref<64x1xf32, #tpu.memory_space<vmem>>, vector<64x1xf32>
    tpu.vector_store %arg9[%c0_19, %c0_20], %36 {strides = array<i32>} : memref<64x1xf32, #tpu.memory_space<vmem>>, vector<64x1xf32>,
    %c0_i32_21 = arith.constant 0 : i32
    %38 = arith.cmpi eq, %arg1, %c0_i32_21 : i32
    %39 = arith.extui %38 : i1 to i32
    %c0_i32_22 = arith.constant 0 : i32
    %40 = arith.cmpi ne, %39, %c0_i32_22 : i32
    scf.if %40 {
      %c0_23 = arith.constant 0 : index
      %c0_24 = arith.constant 0 : index
      %41 = vector.load %arg8[%c0_23, %c0_24] : memref<64x1xf32, #tpu.memory_space<vmem>>, vector<64x1xf32>
      %42 = vector.shape_cast %41 : vector<64x1xf32> to vector<1x64x1xf32>
      %cst_25 = arith.constant dense<0.000000e+00> : vector<1xf32>
      %43 = vector.multi_reduction <add>, %42, %cst_25 [1, 2] : vector<1x64x1xf32> to vector<1xf32>
      %44 = vector.shape_cast %43 : vector<1xf32> to vector<1x1x1xf32>
      %45 = vector.extract %44[0, 0, 0] : f32 from vector<1x1x1xf32>
      %46 = vector.broadcast %45 : f32 to vector<1x1x1xf32>
      %c0_26 = arith.constant 0 : index
      %c0_27 = arith.constant 0 : index
      %c0_28 = arith.constant 0 : index
      %47 = vector.load %arg6[%c0_26, %c0_27, %c0_28] : memref<1x1x1xf32, #tpu.memory_space<vmem>>, vector<1x1x1xf32>
      tpu.vector_store %arg6[%c0_26, %c0_27, %c0_28], %46 {strides = array<i32>} : memref<1x1x1xf32, #tpu.memory_space<vmem>>, vector<1x1x1xf32>,
      %c0_29 = arith.constant 0 : index
      %c0_30 = arith.constant 0 : index
      %48 = vector.load %arg9[%c0_29, %c0_30] : memref<64x1xf32, #tpu.memory_space<vmem>>, vector<64x1xf32>
      %49 = vector.shape_cast %48 : vector<64x1xf32> to vector<1x64x1xf32>
      %cst_31 = arith.constant dense<0.000000e+00> : vector<1xf32>
      %50 = vector.multi_reduction <add>, %49, %cst_31 [1, 2] : vector<1x64x1xf32> to vector<1xf32>
      %51 = vector.shape_cast %50 : vector<1xf32> to vector<1x1x1xf32>
      %52 = vector.extract %51[0, 0, 0] : f32 from vector<1x1x1xf32>
      %53 = vector.broadcast %52 : f32 to vector<1x1x1xf32>
      %c0_32 = arith.constant 0 : index
      %c0_33 = arith.constant 0 : index
      %c0_34 = arith.constant 0 : index
      %54 = vector.load %arg7[%c0_32, %c0_33, %c0_34] : memref<1x1x1xf32, #tpu.memory_space<vmem>>, vector<1x1x1xf32>
      tpu.vector_store %arg7[%c0_32, %c0_33, %c0_34], %53 {strides = array<i32>} : memref<1x1x1xf32, #tpu.memory_space<vmem>>, vector<1x1x1xf32>,
    } else {
    }
    return
  }
  func.func @transform_0(%arg0: i32, %arg1: i32) -> (i32, i32) {
    %c1_i32 = arith.constant 1 : i32
    %0 = arith.muli %arg0, %c1_i32 : i32
    %1 = arith.addi %0, %arg1 : i32
    %c0_i32 = arith.constant 0 : i32
    %c0_i32_0 = arith.constant 0 : i32
    return %1, %c0_i32 : i32, i32
  }
  func.func @transform_1(%arg0: i32, %arg1: i32) -> (i32, i32) {
    %c0_i32 = arith.constant 0 : i32
    %c0_i32_0 = arith.constant 0 : i32
    %c0_i32_1 = arith.constant 0 : i32
    return %c0_i32, %c0_i32_0 : i32, i32
  }
  func.func @transform_2(%arg0: i32, %arg1: i32) -> (i32, i32) {
    %c0_i32 = arith.constant 0 : i32
    %c0_i32_0 = arith.constant 0 : i32
    %c0_i32_1 = arith.constant 0 : i32
    return %c0_i32, %c0_i32_0 : i32, i32
  }
  func.func @transform_3(%arg0: i32, %arg1: i32) -> (i32, i32) {
    %c1_i32 = arith.constant 1 : i32
    %0 = arith.muli %arg0, %c1_i32 : i32
    %1 = arith.addi %0, %arg1 : i32
    %c0_i32 = arith.constant 0 : i32
    %c0_i32_0 = arith.constant 0 : i32
    return %1, %c0_i32 : i32, i32
  }
  func.func @transform_4(%arg0: i32, %arg1: i32) -> (i32, i32, i32) {
    %c0_i32 = arith.constant 0 : i32
    %c0_i32_0 = arith.constant 0 : i32
    %c0_i32_1 = arith.constant 0 : i32
    return %arg0, %c0_i32, %c0_i32_0 : i32, i32, i32
  }
  func.func @transform_5(%arg0: i32, %arg1: i32) -> (i32, i32, i32) {
    %c0_i32 = arith.constant 0 : i32
    %c0_i32_0 = arith.constant 0 : i32
    %c0_i32_1 = arith.constant 0 : i32
    return %arg0, %c0_i32, %c0_i32_0 : i32, i32, i32
  }
}

</mosaic_0001>

<llo_original>
// kernel: tpu_custom_call.1
$region0: #{tpu_custom_call.1}
  #allocation0 [shape = 'u32[]', space=smem, size = 0x4, offset = 0x4, fixed_abs, tag = 'smem constant byte address 0x4 - core index']
  #allocation1 [shape = 'u32[144,128]{1,0:T(1,128)}', space=vmem, size = 0x12000, scoped, tag = 'internal scratch']
  #allocation2 [shape = 'f32[64,1]{1,0:T(8,128)}', space=vmem, size = 0x8000, scoped, tag = 'scratch operand']
  #allocation3 [shape = 'f32[64,1]{1,0:T(8,128)}', space=vmem, size = 0x8000, scoped, tag = 'scratch operand']
  %s0 = inlined_call_operand.vmem [shape: bf16[128,32], index: 0, kind: input, shape index: {}]
  %s1 = inlined_call_operand.vmem [shape: bf16[32,128], index: 1, kind: input, shape index: {}]
  %s2 = inlined_call_operand.vmem [shape: f32[1,128], index: 2, kind: input, shape index: {}]
  %s3 = inlined_call_operand.vmem [shape: s32[128,1], index: 3, kind: input, shape index: {}]
  %s4 = inlined_call_operand.vmem [shape: f32[2,1,1], index: 4, kind: output, shape index: {0}]
  %s5 = inlined_call_operand.vmem [shape: f32[2,1,1], index: 5, kind: output, shape index: {1}]
  %6 = xla_tuple %s4, %s5
  %s7 = sld [smem:[#allocation0]]
  $region65: #{tpu_custom_call.1} parent=0
    _
  %s9 = ssub.s32 1, %s7
  %s10 = scalar_select 0, %s9, %s7
  loop: start=0, step=1, limit=4
  $region2: #{tpu_custom_call.1} parent=0 // loop_pre_header
    _
  $region3: #{tpu_custom_call.1} parent=0 // loop_header
    %s12 = sphi 0, %s16
    %p13 = scmp.ge.s32.totalorder %s12, 4
    %s19 = sphi 0, %s31
    %s20 = sphi 0, %s27
    %s21 = sphi 0, %s19
    %s22 = sphi 0, %s20
    %s23 = sphi 0, %s21
    %s24 = sphi 0, %s22
    %s36 = sphi 0, %s38
    %s39 = sphi 0, %s36
    %s40 = sphi 0, %s39
    %s56 = sphi 0, %s40
    %s60 = sphi 0, %s60
    %s62 = sphi 0, %s60
    %s63 = sphi 0, %s62
    %s77 = sphi 0, %s63
    %s81 = sphi 0, %s81
    %s83 = sphi 0, %s81
    %s84 = sphi 0, %s83
    %s98 = sphi 0, %s84
    %s106 = sphi 0, %s108
    %s109 = sphi 0, %s106
    %s110 = sphi 0, %s109
    %s126 = sphi 0, %s110
    %s132 = sphi 0, %s134
    %s135 = sphi 0, %s132
    %s136 = sphi 0, %s135
    %s152 = sphi 0, %s136
    %s158 = sphi 0, %s160
    %s161 = sphi 0, %s158
    %s162 = sphi 0, %s161
    %s178 = sphi 0, %s162
  $region4: #{tpu_custom_call.1} parent=0 // loop_header_branch
    %15 = sbr.rel (%p13) target = $region8
  $region5: #{tpu_custom_call.1} parent=0 // loop_body
    %s17 = ssub.s32 %s12, 1
    %s18 = ssub.s32 %s12, 2
    %s25 = sadd.s32 1, %s20
    %p26 = scmp.ge.s32.totalorder %s25, 1
    %s27 = scalar_select %p26, 0, %s25
    %s28 = sadd.s32 1, %s19
    %s29 = scalar_select %p26, %s28, %s19
    %p30 = scmp.ge.s32.totalorder %s29, 2
    %s31 = scalar_select %p30, 0, %s29
    %s32 = sadd.s32 %s19, %s20
    %s33 = sadd.s32 %s31, %s27
    %s34 = ssub.s32 %s32, %s33
    %p35 = scmp.eq.s32.totalorder %s34, 0
    %s37 = sadd.s32 %s36, 1
    %s38 = scalar_select %p35, %s36, %s37
    %p41 = pneg %p35
    %p42 = scmp.eq.s32.totalorder %s12, 1
    %p43 = por %p41, %p42
    %p44 = scmp.ne.s32.totalorder %s36, %s39
    %p45 = scmp.eq.s32.totalorder %s12, 0
    %p46 = por %p44, %p45
    %p47 = scmp.ne.s32.totalorder %s36, %s39
    %p48 = scmp.eq.s32.totalorder %s17, 1
    %p49 = por %p47, %p48
    %p50 = scmp.ne.s32.totalorder %s39, %s40
    %p51 = scmp.eq.s32.totalorder %s17, 0
    %p52 = por %p50, %p51
    %p53 = scmp.ne.s32.totalorder %s39, %s40
    %p54 = scmp.eq.s32.totalorder %s18, 1
    %p55 = por %p53, %p54
    %p57 = scmp.ne.s32.totalorder %s40, %s56
    %p58 = scmp.eq.s32.totalorder %s18, 0
    %p59 = por %p57, %p58
    %s61 = sadd.s32 %s60, 1
    %p64 = scmp.eq.s32.totalorder %s12, 1
    %p65 = scmp.ne.s32.totalorder %s60, %s62
    %p66 = scmp.eq.s32.totalorder %s12, 0
    %p67 = por %p65, %p66
    %p68 = scmp.ne.s32.totalorder %s60, %s62
    %p69 = scmp.eq.s32.totalorder %s17, 1
    %p70 = por %p68, %p69
    %p71 = scmp.ne.s32.totalorder %s62, %s63
    %p72 = scmp.eq.s32.totalorder %s17, 0
    %p73 = por %p71, %p72
    %p74 = scmp.ne.s32.totalorder %s62, %s63
    %p75 = scmp.eq.s32.totalorder %s18, 1
    %p76 = por %p74, %p75
    %p78 = scmp.ne.s32.totalorder %s63, %s77
    %p79 = scmp.eq.s32.totalorder %s18, 0
    %p80 = por %p78, %p79
    %s82 = sadd.s32 %s81, 1
    %p85 = scmp.eq.s32.totalorder %s12, 1
    %p86 = scmp.ne.s32.totalorder %s81, %s83
    %p87 = scmp.eq.s32.totalorder %s12, 0
    %p88 = por %p86, %p87
    %p89 = scmp.ne.s32.totalorder %s81, %s83
    %p90 = scmp.eq.s32.totalorder %s17, 1
    %p91 = por %p89, %p90
    %p92 = scmp.ne.s32.totalorder %s83, %s84
    %p93 = scmp.eq.s32.totalorder %s17, 0
    %p94 = por %p92, %p93
    %p95 = scmp.ne.s32.totalorder %s83, %s84
    %p96 = scmp.eq.s32.totalorder %s18, 1
    %p97 = por %p95, %p96
    %p99 = scmp.ne.s32.totalorder %s84, %s98
    %p100 = scmp.eq.s32.totalorder %s18, 0
    %p101 = por %p99, %p100
    %s102 = sadd.s32 %s19, %s20
    %s103 = sadd.s32 %s31, %s27
    %s104 = ssub.s32 %s102, %s103
    %p105 = scmp.eq.s32.totalorder %s104, 0
    %s107 = sadd.s32 %s106, 1
    %s108 = scalar_select %p105, %s106, %s107
    %p111 = pneg %p105
    %p112 = scmp.eq.s32.totalorder %s12, 1
    %p113 = por %p111, %p112
    %p114 = scmp.ne.s32.totalorder %s106, %s109
    %p115 = scmp.eq.s32.totalorder %s12, 0
    %p116 = por %p114, %p115
    %p117 = scmp.ne.s32.totalorder %s106, %s109
    %p118 = scmp.eq.s32.totalorder %s17, 1
    %p119 = por %p117, %p118
    %p120 = scmp.ne.s32.totalorder %s109, %s110
    %p121 = scmp.eq.s32.totalorder %s17, 0
    %p122 = por %p120, %p121
    %p123 = scmp.ne.s32.totalorder %s109, %s110
    %p124 = scmp.eq.s32.totalorder %s18, 1
    %p125 = por %p123, %p124
    %p127 = scmp.ne.s32.totalorder %s110, %s126
    %p128 = scmp.eq.s32.totalorder %s18, 0
    %p129 = por %p127, %p128
    %s130 = ssub.s32 %s19, %s31
    %p131 = scmp.eq.s32.totalorder %s130, 0
    %s133 = sadd.s32 %s132, 1
    %s134 = scalar_select %p131, %s132, %s133
    %p137 = pneg %p131
    %p138 = scmp.eq.s32.totalorder %s12, 1
    %p139 = por %p137, %p138
    %p140 = scmp.ne.s32.totalorder %s132, %s135
    %p141 = scmp.eq.s32.totalorder %s12, 0
    %p142 = por %p140, %p141
    %p143 = scmp.ne.s32.totalorder %s132, %s135
    %p144 = scmp.eq.s32.totalorder %s17, 1
    %p145 = por %p143, %p144
    %p146 = scmp.ne.s32.totalorder %s135, %s136
    %p147 = scmp.eq.s32.totalorder %s17, 0
    %p148 = por %p146, %p147
    %p149 = scmp.ne.s32.totalorder %s135, %s136
    %p150 = scmp.eq.s32.totalorder %s18, 1
    %p151 = por %p149, %p150
    %p153 = scmp.ne.s32.totalorder %s136, %s152
    %p154 = scmp.eq.s32.totalorder %s18, 0
    %p155 = por %p153, %p154
    %s156 = ssub.s32 %s19, %s31
    %p157 = scmp.eq.s32.totalorder %s156, 0
    %s159 = sadd.s32 %s158, 1
    %s160 = scalar_select %p157, %s158, %s159
    %p163 = pneg %p157
    %p164 = scmp.eq.s32.totalorder %s12, 1
    %p165 = por %p163, %p164
    %p166 = scmp.ne.s32.totalorder %s158, %s161
    %p167 = scmp.eq.s32.totalorder %s12, 0
    %p168 = por %p166, %p167
    %p169 = scmp.ne.s32.totalorder %s158, %s161
    %p170 = scmp.eq.s32.totalorder %s17, 1
    %p171 = por %p169, %p170
    %p172 = scmp.ne.s32.totalorder %s161, %s162
    %p173 = scmp.eq.s32.totalorder %s17, 0
    %p174 = por %p172, %p173
    %p175 = scmp.ne.s32.totalorder %s161, %s162
    %p176 = scmp.eq.s32.totalorder %s18, 1
    %p177 = por %p175, %p176
    %p179 = scmp.ne.s32.totalorder %s162, %s178
    %p180 = scmp.eq.s32.totalorder %s18, 0
    %p181 = por %p179, %p180
    %p182 = scmp.le.s32.totalorder 1, %s12
    %p183 = scmp.lt.s32.totalorder %s12, 3
    %p184 = pnand %p182, %p183
    %p185 = pneg %p184
    // Predicated region
    $region9: #{tpu_custom_call.1} parent=5 // pred_check
      _
    $region10: #{tpu_custom_call.1} parent=5 // pred_check_branch
      %187 = sbr.rel (%p184) target = $region12
    $region11: #{tpu_custom_call.1} parent=5 // pred_region
      %s188 = ssub.s32 %s12, 1
      // Predicated region
      $region13: #{tpu_custom_call.1} parent=11 // pred_check
        %p189 = pneg %p73
      $region14: #{tpu_custom_call.1} parent=11 // pred_check_branch
        %191 = sbr.rel (%p189) target = $region16
      $region15: #{tpu_custom_call.1} parent=11 // pred_region
        _
      $region16: #{tpu_custom_call.1} parent=11 // pred_fallthru
        _
      // Predicated region
      $region17: #{tpu_custom_call.1} parent=11 // pred_check
        %p192 = pneg %p94
      $region18: #{tpu_custom_call.1} parent=11 // pred_check_branch
        %194 = sbr.rel (%p192) target = $region20
      $region19: #{tpu_custom_call.1} parent=11 // pred_region
        _
      $region20: #{tpu_custom_call.1} parent=11 // pred_fallthru
        _
    $region12: #{tpu_custom_call.1} parent=5 // pred_fallthru
      _
    %p195 = scmp.lt.s32.totalorder %s12, 2
    // Predicated region
    $region21: #{tpu_custom_call.1} parent=5 // pred_check
      %p196 = pneg %p195
    $region22: #{tpu_custom_call.1} parent=5 // pred_check_branch
      %198 = sbr.rel (%p196) target = $region24
    $region23: #{tpu_custom_call.1} parent=5 // pred_region
      // Predicated region
      $region25: #{tpu_custom_call.1} parent=23 // pred_check
        %p199 = pneg %p46
      $region26: #{tpu_custom_call.1} parent=23 // pred_check_branch
        %201 = sbr.rel (%p199) target = $region28
      $region27: #{tpu_custom_call.1} parent=23 // pred_region
        %s202 = sadd.s32 %s19, %s20
        %s203 = smul.u32 8, %s202
        %p204 = scmp.lt.s32.totalorder %s203, 15
        %s205 = scalar_select %p204, %s203, 15
        %s206 = smul.addr %s205, 4
        %s207 = scalar_lea.vmem %s0, %s206
        %s208 = sadd.s32 %s19, %s20
        %s209 = smul.u32 8, %s208
      $region28: #{tpu_custom_call.1} parent=23 // pred_fallthru
        _
      // Predicated region
      $region29: #{tpu_custom_call.1} parent=23 // pred_check
        %p210 = pneg %p116
      $region30: #{tpu_custom_call.1} parent=23 // pred_check_branch
        %212 = sbr.rel (%p210) target = $region32
      $region31: #{tpu_custom_call.1} parent=23 // pred_region
        %s213 = sadd.s32 %s19, %s20
        %s214 = smul.u32 8, %s213
        %p215 = scmp.lt.s32.totalorder %s214, 15
        %s216 = scalar_select %p215, %s214, 15
        %s217 = smul.addr %s216, 8
        %s218 = scalar_lea.vmem %s3, %s217
        %s219 = sadd.s32 %s19, %s20
        %s220 = smul.u32 8, %s219
      $region32: #{tpu_custom_call.1} parent=23 // pred_fallthru
        _
    $region24: #{tpu_custom_call.1} parent=5 // pred_fallthru
      _
    %p221 = scmp.le.s32.totalorder 1, %s12
    %p222 = scmp.lt.s32.totalorder %s12, 3
    %p223 = pnand %p221, %p222
    %p224 = pneg %p223
    // Predicated region
    $region33: #{tpu_custom_call.1} parent=5 // pred_check
      _
    $region34: #{tpu_custom_call.1} parent=5 // pred_check_branch
      %226 = sbr.rel (%p223) target = $region36
    $region35: #{tpu_custom_call.1} parent=5 // pred_region
      %s227 = ssub.s32 %s12, 1
      %s228 = sadd.s32 %s21, %s22
      %s229 = smul.u32 8, %s228
      %p230 = scmp.lt.s32.totalorder %s229, 15
      %s231 = scalar_select %p230, %s229, 15
      %s232 = smul.addr %s231, 4
      %s233 = scalar_lea.vmem %s0, %s232
      %p234 = pneg %p52
      %p235 = pneg %p49
      %p236 = pneg %p73
      %p237 = pneg %p70
      %p238 = pneg %p94
      %p239 = pneg %p91
      %s240 = sadd.s32 %s21, %s22
      %s241 = smul.u32 8, %s240
      %p242 = scmp.lt.s32.totalorder %s241, 15
      %s243 = scalar_select %p242, %s241, 15
      %s244 = smul.addr %s243, 8
      %s245 = scalar_lea.vmem %s3, %s244
      %p246 = pneg %p122
      %p247 = pneg %p119
      %p248 = pneg %p148
      %p249 = pneg %p145
      %p250 = scmp.lt.s32.totalorder %s21, 1
      %s251 = scalar_select %p250, %s21, 1
      %s252 = scalar_lea.vmem %s4, %s251
      %p253 = pneg %p174
      %p254 = pneg %p171
      %p255 = scmp.lt.s32.totalorder %s21, 1
      %s256 = scalar_select %p255, %s21, 1
      %s257 = scalar_lea.vmem %s5, %s256
      %s258 = sadd.s32 %s21, %s22
      %s259 = smul.u32 8, %s258
      %p260 = scmp.lt.s32.totalorder %s259, 15
      %s261 = scalar_select %p260, %s259, 15
      %s262 = smul.addr %s261, 4
      %s263 = scalar_lea.vmem %s0, %s262
      %s264 = sadd.s32 %s21, %s22
      %s265 = smul.u32 8, %s264
      %s266 = sadd.s32 %s21, %s22
      %s267 = smul.u32 8, %s266
      %p268 = scmp.lt.s32.totalorder %s267, 15
      %s269 = scalar_select %p268, %s267, 15
      %s270 = smul.addr %s269, 8
      %s271 = scalar_lea.vmem %s3, %s270
      %s272 = sadd.s32 %s21, %s22
      %s273 = smul.u32 8, %s272
      %p274 = scmp.lt.s32.totalorder %s21, 1
      %s275 = scalar_select %p274, %s21, 1
      %s276 = scalar_lea.vmem %s4, %s275
      %p277 = scmp.lt.s32.totalorder %s21, 1
      %s278 = scalar_select %p277, %s21, 1
      %s279 = scalar_lea.vmem %s5, %s278
      %p281 = scmp.eq.s32.totalorder %s22, 0
      // Predicated region
      $region37: #{tpu_custom_call.1} parent=35 // pred_check
        %p282 = pneg %p281
      $region38: #{tpu_custom_call.1} parent=35 // pred_check_branch
        %284 = sbr.rel (%p282) target = $region40
      $region39: #{tpu_custom_call.1} parent=35 // pred_region
        %vm285 = vcmask 7168
        %286 = vst.msk [vmem:[#allocation2] sm:$0xff] %vm285, 0.0
        %287 = vst.msk [vmem:[#allocation2 + $0x8] sm:$0xff] %vm285, 0.0
        %288 = vst.msk [vmem:[#allocation2 + $0x10] sm:$0xff] %vm285, 0.0
        %289 = vst.msk [vmem:[#allocation2 + $0x18] sm:$0xff] %vm285, 0.0
        %290 = vst.msk [vmem:[#allocation2 + $0x20] sm:$0xff] %vm285, 0.0
        %291 = vst.msk [vmem:[#allocation2 + $0x28] sm:$0xff] %vm285, 0.0
        %292 = vst.msk [vmem:[#allocation2 + $0x30] sm:$0xff] %vm285, 0.0
        %293 = vst.msk [vmem:[#allocation2 + $0x38] sm:$0xff] %vm285, 0.0
        %294 = vst.msk [vmem:[#allocation3] sm:$0xff] %vm285, 0.0
        %295 = vst.msk [vmem:[#allocation3 + $0x8] sm:$0xff] %vm285, 0.0
        %296 = vst.msk [vmem:[#allocation3 + $0x10] sm:$0xff] %vm285, 0.0
        %297 = vst.msk [vmem:[#allocation3 + $0x18] sm:$0xff] %vm285, 0.0
        %298 = vst.msk [vmem:[#allocation3 + $0x20] sm:$0xff] %vm285, 0.0
        %299 = vst.msk [vmem:[#allocation3 + $0x28] sm:$0xff] %vm285, 0.0
        %300 = vst.msk [vmem:[#allocation3 + $0x30] sm:$0xff] %vm285, 0.0
        %301 = vst.msk [vmem:[#allocation3 + $0x38] sm:$0xff] %vm285, 0.0
      $region40: #{tpu_custom_call.1} parent=35 // pred_fallthru
        _
      %v302 = vld [vmem:[%s263] sm:$0xf]
      %v303 = vld [vmem:[%s263 + $0x4] sm:$0xf]
      %v304 = vld [vmem:[%s263 + $0x8] sm:$0xf]
      %v305 = vld [vmem:[%s263 + $0xc] sm:$0xf]
      %v306 = vld [vmem:[%s263 + $0x10] sm:$0xf]
      %v307 = vld [vmem:[%s263 + $0x14] sm:$0xf]
      %v308 = vld [vmem:[%s263 + $0x18] sm:$0xf]
      %v309 = vld [vmem:[%s263 + $0x1c] sm:$0xf]
      %v310 = vld [vmem:[%s1] sm:$0xf]
      %v311 = vld [vmem:[%s1 + $0x4] sm:$0xf]
      %v312 = vld [vmem:[%s1 + $0x8] sm:$0xf]
      %v313 = vld [vmem:[%s1 + $0xc] sm:$0xf]
      %v314 = vld [vmem:[%s2] sm:$0x1]
      %v316 = vlaneseq
      %v317 = vshrl.u32 %v316, 7
      %v318 = vsub.s32 0, %v317
      %v319 = vrot.slane %v314, %v318
      %v329 = vunpack.c.l.b16 %v302
      %v330 = vunpack.c.l.b16 %v303
      %v331 = vunpack.c.l.b16 %v304
      %v332 = vunpack.c.l.b16 %v305
      %v333 = vunpack.c.l.b16 %v306
      %v334 = vunpack.c.l.b16 %v307
      %v335 = vunpack.c.l.b16 %v308
      %v336 = vunpack.c.l.b16 %v309
      %v337 = vpack.c.b16 %v330, %v329
      %v338 = vpack.c.b16 %v332, %v331
      %v339 = vpack.c.b16 %v334, %v333
      %v340 = vpack.c.b16 %v336, %v335
      %v345 = vunpack.c.l.b16 %v310
      %v346 = vunpack.c.l.b16 %v311
      %v347 = vunpack.c.l.b16 %v312
      %v348 = vunpack.c.l.b16 %v313
      %v349 = vpack.c.b16 %v346, %v345
      %v350 = vpack.c.b16 %v348, %v347
      %vm353 = vcmask 261120
      %v355 = vsel %vm353, %v337, 0
      %v358 = vsel %vm353, %v338, 0
      %v361 = vsel %vm353, %v339, 0
      %v364 = vsel %vm353, %v340, 0
      %366 = vmatprep.subr.bf16.mxu0 0
      %367 = vmatpush1.bf16.msra.mxu0 0
      %368 = vmatprep.subr.bf16.mxu0 0
      %369 = vmatpush1.bf16.msra.mxu0 0
      %370 = vmatprep.subr.bf16.mxu0 0
      %371 = vmatpush1.bf16.msra.mxu0 0
      %372 = vmatprep.subr.bf16.mxu0 0
      %373 = vmatpush1.bf16.msra.mxu0 0
      %374 = vmatprep.subr.bf16.mxu0 0
      %375 = vmatpush1.bf16.msra.mxu0 0
      %376 = vmatprep.subr.bf16.mxu0 0
      %377 = vmatpush1.bf16.msra.mxu0 0
      %378 = vmatprep.subr.bf16.mxu0 0
      %379 = vmatpush1.bf16.msra.mxu0 %v350
      %380 = vmatprep.subr.bf16.mxu0 0
      %381 = vmatpush1.bf16.msra.mxu0 %v349
      %382 = vmatprep.subr.bf16.mxu0 0
      %383 = vmatpush2.bf16.msra.mxu0 0
      %384 = vmatprep.subr.bf16.mxu0 0
      %385 = vmatpush2.bf16.msra.mxu0 0
      %386 = vmatprep.subr.bf16.mxu0 0
      %387 = vmatpush2.bf16.msra.mxu0 0
      %388 = vmatprep.subr.bf16.mxu0 0
      %389 = vmatpush2.bf16.msra.mxu0 0
      %390 = vmatprep.subr.bf16.mxu0 0
      %391 = vmatpush2.bf16.msra.mxu0 0
      %392 = vmatprep.subr.bf16.mxu0 0
      %393 = vmatpush2.bf16.msra.mxu0 0
      %394 = vmatprep.subr.bf16.mxu0 0
      %395 = vmatpush2.bf16.msra.mxu0 0
      %396 = vmatprep.subr.bf16.mxu0 0
      %397 = vmatpush2.bf16.msra.mxu0 0
      %398 = vmatprep.mubr.bf16.mxu0 0
      %399 = vmatmul.mubr.bf16.gmra.mxu0 %v355
      %v400 = vpop.f32.mrf.mxu0
      %v401 = vadd.f32 %v319, %v400
      %v402 = vpop.f32.mrf.mxu0
      %v403 = vpop.f32.mrf.mxu0
      %v404 = vadd.f32 %v319, %v403
      %v405 = vpop.f32.mrf.mxu0
      %406 = vmatprep.mubr.bf16.mxu0 0
      %407 = vmatmul.mubr.bf16.gmra.mxu0 %v358
      %v408 = vpop.f32.mrf.mxu0
      %v409 = vadd.f32 %v319, %v408
      %v410 = vpop.f32.mrf.mxu0
      %v411 = vpop.f32.mrf.mxu0
      %v412 = vadd.f32 %v319, %v411
      %v413 = vpop.f32.mrf.mxu0
      %414 = vmatprep.mubr.bf16.mxu0 0
      %415 = vmatmul.mubr.bf16.gmra.mxu0 %v361
      %v416 = vpop.f32.mrf.mxu0
      %v417 = vadd.f32 %v319, %v416
      %v418 = vpop.f32.mrf.mxu0
      %v419 = vpop.f32.mrf.mxu0
      %v420 = vadd.f32 %v319, %v419
      %v421 = vpop.f32.mrf.mxu0
      %422 = vmatprep.mubr.bf16.mxu0 0
      %423 = vmatmul.mubr.bf16.gmra.mxu0 %v364
      %v424 = vpop.f32.mrf.mxu0
      %v425 = vadd.f32 %v319, %v424
      %v426 = vpop.f32.mrf.mxu0
      %v427 = vpop.f32.mrf.mxu0
      %v428 = vadd.f32 %v319, %v427
      %v429 = vpop.f32.mrf.mxu0
      %430 = vdwg.mxu0
      %431 = vmax.xlane.f32.xlu0 %v401
      %v432 = vpop.xlane.xlu0 %431
      %433 = vmax.xlane.f32.xlu0 %v404
      %v434 = vpop.xlane.xlu0 %433
      %435 = vmax.xlane.f32.xlu0 %v409
      %v436 = vpop.xlane.xlu0 %435
      %437 = vmax.xlane.f32.xlu0 %v412
      %v438 = vpop.xlane.xlu0 %437
      %439 = vmax.xlane.f32.xlu0 %v417
      %v440 = vpop.xlane.xlu0 %439
      %441 = vmax.xlane.f32.xlu0 %v420
      %v442 = vpop.xlane.xlu0 %441
      %443 = vmax.xlane.f32.xlu0 %v425
      %v444 = vpop.xlane.xlu0 %443
      %445 = vmax.xlane.f32.xlu0 %v428
      %v446 = vpop.xlane.xlu0 %445
      %v447 = vsub.f32 %v401, %v432
      %v448 = vsub.f32 %v404, %v434
      %v449 = vsub.f32 %v409, %v436
      %v450 = vsub.f32 %v412, %v438
      %v451 = vsub.f32 %v417, %v440
      %v452 = vsub.f32 %v420, %v442
      %v453 = vsub.f32 %v425, %v444
      %v454 = vsub.f32 %v428, %v446
      %v455 = vmul.f32 %v447, 1.442695
      %v456 = vpow.pop %v455
      %v457 = vmul.f32 %v448, 1.442695
      %v458 = vpow.pop %v457
      %v459 = vmul.f32 %v449, 1.442695
      %v460 = vpow.pop %v459
      %v461 = vmul.f32 %v450, 1.442695
      %v462 = vpow.pop %v461
      %v463 = vmul.f32 %v451, 1.442695
      %v464 = vpow.pop %v463
      %v465 = vmul.f32 %v452, 1.442695
      %v466 = vpow.pop %v465
      %v467 = vmul.f32 %v453, 1.442695
      %v468 = vpow.pop %v467
      %v469 = vmul.f32 %v454, 1.442695
      %v470 = vpow.pop %v469
      %471 = vadd.xlane.f32.xlu0 %v456
      %v472 = vpop.xlane.xlu0 %471
      %473 = vadd.xlane.f32.xlu0 %v458
      %v474 = vpop.xlane.xlu0 %473
      %475 = vadd.xlane.f32.xlu0 %v460
      %v476 = vpop.xlane.xlu0 %475
      %477 = vadd.xlane.f32.xlu0 %v462
      %v478 = vpop.xlane.xlu0 %477
      %479 = vadd.xlane.f32.xlu0 %v464
      %v480 = vpop.xlane.xlu0 %479
      %481 = vadd.xlane.f32.xlu0 %v466
      %v482 = vpop.xlane.xlu0 %481
      %483 = vadd.xlane.f32.xlu0 %v468
      %v484 = vpop.xlane.xlu0 %483
      %485 = vadd.xlane.f32.xlu0 %v470
      %v486 = vpop.xlane.xlu0 %485
      %v487 = vlog2.pop %v472
      %v488 = vmul.f32 %v487, 0.6931472
      %v489 = vlog2.pop %v474
      %v490 = vmul.f32 %v489, 0.6931472
      %v491 = vlog2.pop %v476
      %v492 = vmul.f32 %v491, 0.6931472
      %v493 = vlog2.pop %v478
      %v494 = vmul.f32 %v493, 0.6931472
      %v495 = vlog2.pop %v480
      %v496 = vmul.f32 %v495, 0.6931472
      %v497 = vlog2.pop %v482
      %v498 = vmul.f32 %v497, 0.6931472
      %v499 = vlog2.pop %v484
      %v500 = vmul.f32 %v499, 0.6931472
      %v501 = vlog2.pop %v486
      %v502 = vmul.f32 %v501, 0.6931472
      %v503 = vadd.f32 %v432, %v488
      %v504 = vadd.f32 %v434, %v490
      %v505 = vadd.f32 %v436, %v492
      %v506 = vadd.f32 %v438, %v494
      %v507 = vadd.f32 %v440, %v496
      %v508 = vadd.f32 %v442, %v498
      %v509 = vadd.f32 %v444, %v500
      %v510 = vadd.f32 %v446, %v502
      %v511 = vld [vmem:[%s271] sm:$0xff]
      %v512 = vld [vmem:[%s271 + $0x8] sm:$0xff]
      %v513 = vld [vmem:[%s271 + $0x10] sm:$0xff]
      %v514 = vld [vmem:[%s271 + $0x18] sm:$0xff]
      %v515 = vld [vmem:[%s271 + $0x20] sm:$0xff]
      %v516 = vld [vmem:[%s271 + $0x28] sm:$0xff]
      %v517 = vld [vmem:[%s271 + $0x30] sm:$0xff]
      %v518 = vld [vmem:[%s271 + $0x38] sm:$0xff]
      %v519 = vlaneseq
      %v520 = vand.u32 %v519, 127
      %521 = vset.pattern.permute.xlu0 0
      %522 = vperm.xlu0 %521, %v511
      %v523 = vpop.permute.xlu0 %522
      %524 = vset.pattern.permute.xlu0 0
      %525 = vperm.xlu0 %524, %v512
      %v526 = vpop.permute.xlu0 %525
      %527 = vset.pattern.permute.xlu0 0
      %528 = vperm.xlu0 %527, %v513
      %v529 = vpop.permute.xlu0 %528
      %530 = vset.pattern.permute.xlu0 0
      %531 = vperm.xlu0 %530, %v514
      %v532 = vpop.permute.xlu0 %531
      %533 = vset.pattern.permute.xlu0 0
      %534 = vperm.xlu0 %533, %v515
      %v535 = vpop.permute.xlu0 %534
      %536 = vset.pattern.permute.xlu0 0
      %537 = vperm.xlu0 %536, %v516
      %v538 = vpop.permute.xlu0 %537
      %539 = vset.pattern.permute.xlu0 0
      %540 = vperm.xlu0 %539, %v517
      %v541 = vpop.permute.xlu0 %540
      %542 = vset.pattern.permute.xlu0 0
      %543 = vperm.xlu0 %542, %v518
      %v544 = vpop.permute.xlu0 %543
      %vm545 = vcmp.eq.s32.totalorder %v520, %v523
      %vm546 = vcmp.eq.s32.totalorder %v520, %v526
      %vm547 = vcmp.eq.s32.totalorder %v520, %v529
      %vm548 = vcmp.eq.s32.totalorder %v520, %v532
      %vm549 = vcmp.eq.s32.totalorder %v520, %v535
      %vm550 = vcmp.eq.s32.totalorder %v520, %v538
      %vm551 = vcmp.eq.s32.totalorder %v520, %v541
      %vm552 = vcmp.eq.s32.totalorder %v520, %v544
      %v553 = vsel %vm545, %v401, 0.0
      %v554 = vsel %vm546, %v404, 0.0
      %v555 = vsel %vm547, %v409, 0.0
      %v556 = vsel %vm548, %v412, 0.0
      %v557 = vsel %vm549, %v417, 0.0
      %v558 = vsel %vm550, %v420, 0.0
      %v559 = vsel %vm551, %v425, 0.0
      %v560 = vsel %vm552, %v428, 0.0
      %561 = vadd.xlane.f32.xlu0 %v553
      %v562 = vpop.xlane.xlu0 %561
      %563 = vadd.xlane.f32.xlu0 %v554
      %v564 = vpop.xlane.xlu0 %563
      %565 = vadd.xlane.f32.xlu0 %v555
      %v566 = vpop.xlane.xlu0 %565
      %567 = vadd.xlane.f32.xlu0 %v556
      %v568 = vpop.xlane.xlu0 %567
      %569 = vadd.xlane.f32.xlu0 %v557
      %v570 = vpop.xlane.xlu0 %569
      %571 = vadd.xlane.f32.xlu0 %v558
      %v572 = vpop.xlane.xlu0 %571
      %573 = vadd.xlane.f32.xlu0 %v559
      %v574 = vpop.xlane.xlu0 %573
      %575 = vadd.xlane.f32.xlu0 %v560
      %v576 = vpop.xlane.xlu0 %575
      %vm577 = vcmp.ge.s32.totalorder %v511, 0
      %vm578 = vcmp.ge.s32.totalorder %v512, 0
      %vm579 = vcmp.ge.s32.totalorder %v513, 0
      %vm580 = vcmp.ge.s32.totalorder %v514, 0
      %vm581 = vcmp.ge.s32.totalorder %v515, 0
      %vm582 = vcmp.ge.s32.totalorder %v516, 0
      %vm583 = vcmp.ge.s32.totalorder %v517, 0
      %vm584 = vcmp.ge.s32.totalorder %v518, 0
      %v585 = vsel %vm577, 1, 0
      %v586 = vsel %vm578, 1, 0
      %v587 = vsel %vm579, 1, 0
      %v588 = vsel %vm580, 1, 0
      %v589 = vsel %vm581, 1, 0
      %v590 = vsel %vm582, 1, 0
      %v591 = vsel %vm583, 1, 0
      %v592 = vsel %vm584, 1, 0
      %v593 = vcvt.s32.f32 %v585
      %v594 = vcvt.s32.f32 %v586
      %v595 = vcvt.s32.f32 %v587
      %v596 = vcvt.s32.f32 %v588
      %v597 = vcvt.s32.f32 %v589
      %v598 = vcvt.s32.f32 %v590
      %v599 = vcvt.s32.f32 %v591
      %v600 = vcvt.s32.f32 %v592
      %v601 = vld [vmem:[#allocation2] sm:$0xff]
      %v602 = vld [vmem:[#allocation2 + $0x8] sm:$0xff]
      %v603 = vld [vmem:[#allocation2 + $0x10] sm:$0xff]
      %v604 = vld [vmem:[#allocation2 + $0x18] sm:$0xff]
      %v605 = vld [vmem:[#allocation2 + $0x20] sm:$0xff]
      %v606 = vld [vmem:[#allocation2 + $0x28] sm:$0xff]
      %v607 = vld [vmem:[#allocation2 + $0x30] sm:$0xff]
      %v608 = vld [vmem:[#allocation2 + $0x38] sm:$0xff]
      %v609 = vsub.f32 %v503, %v562
      %v610 = vsub.f32 %v504, %v564
      %v611 = vsub.f32 %v505, %v566
      %v612 = vsub.f32 %v506, %v568
      %v613 = vsub.f32 %v507, %v570
      %v614 = vsub.f32 %v508, %v572
      %v615 = vsub.f32 %v509, %v574
      %v616 = vsub.f32 %v510, %v576
      %v617 = vmul.f32 %v609, %v593
      %v618 = vmul.f32 %v610, %v594
      %v619 = vmul.f32 %v611, %v595
      %v620 = vmul.f32 %v612, %v596
      %v621 = vmul.f32 %v613, %v597
      %v622 = vmul.f32 %v614, %v598
      %v623 = vmul.f32 %v615, %v599
      %v624 = vmul.f32 %v616, %v600
      %v625 = vadd.f32 %v601, %v617
      %v626 = vadd.f32 %v602, %v618
      %v627 = vadd.f32 %v603, %v619
      %v628 = vadd.f32 %v604, %v620
      %v629 = vadd.f32 %v605, %v621
      %v630 = vadd.f32 %v606, %v622
      %v631 = vadd.f32 %v607, %v623
      %v632 = vadd.f32 %v608, %v624
      %vm633 = vcmask 7168
      %634 = vst.msk [vmem:[#allocation2] sm:$0xff] %vm633, %v625
      %635 = vst.msk [vmem:[#allocation2 + $0x8] sm:$0xff] %vm633, %v626
      %636 = vst.msk [vmem:[#allocation2 + $0x10] sm:$0xff] %vm633, %v627
      %637 = vst.msk [vmem:[#allocation2 + $0x18] sm:$0xff] %vm633, %v628
      %638 = vst.msk [vmem:[#allocation2 + $0x20] sm:$0xff] %vm633, %v629
      %639 = vst.msk [vmem:[#allocation2 + $0x28] sm:$0xff] %vm633, %v630
      %640 = vst.msk [vmem:[#allocation2 + $0x30] sm:$0xff] %vm633, %v631
      %641 = vst.msk [vmem:[#allocation2 + $0x38] sm:$0xff] %vm633, %v632
      %v642 = vld [vmem:[#allocation3] sm:$0xff]
      %v643 = vld [vmem:[#allocation3 + $0x8] sm:$0xff]
      %v644 = vld [vmem:[#allocation3 + $0x10] sm:$0xff]
      %v645 = vld [vmem:[#allocation3 + $0x18] sm:$0xff]
      %v646 = vld [vmem:[#allocation3 + $0x20] sm:$0xff]
      %v647 = vld [vmem:[#allocation3 + $0x28] sm:$0xff]
      %v648 = vld [vmem:[#allocation3 + $0x30] sm:$0xff]
      %v649 = vld [vmem:[#allocation3 + $0x38] sm:$0xff]
      %v650 = vadd.f32 %v642, %v593
      %v651 = vadd.f32 %v643, %v594
      %v652 = vadd.f32 %v644, %v595
      %v653 = vadd.f32 %v645, %v596
      %v654 = vadd.f32 %v646, %v597
      %v655 = vadd.f32 %v647, %v598
      %v656 = vadd.f32 %v648, %v599
      %v657 = vadd.f32 %v649, %v600
      %658 = vst.msk [vmem:[#allocation3] sm:$0xff] %vm633, %v650
      %659 = vst.msk [vmem:[#allocation3 + $0x8] sm:$0xff] %vm633, %v651
      %660 = vst.msk [vmem:[#allocation3 + $0x10] sm:$0xff] %vm633, %v652
      %661 = vst.msk [vmem:[#allocation3 + $0x18] sm:$0xff] %vm633, %v653
      %662 = vst.msk [vmem:[#allocation3 + $0x20] sm:$0xff] %vm633, %v654
      %663 = vst.msk [vmem:[#allocation3 + $0x28] sm:$0xff] %vm633, %v655
      %664 = vst.msk [vmem:[#allocation3 + $0x30] sm:$0xff] %vm633, %v656
      %665 = vst.msk [vmem:[#allocation3 + $0x38] sm:$0xff] %vm633, %v657
      // Predicated region
      $region41: #{tpu_custom_call.1} parent=35 // pred_check
        %p666 = pneg %p281
      $region42: #{tpu_custom_call.1} parent=35 // pred_check_branch
        %668 = sbr.rel (%p666) target = $region44
      $region43: #{tpu_custom_call.1} parent=35 // pred_region
        %v669 = vld [vmem:[#allocation2] sm:$0xff]
        %v670 = vld [vmem:[#allocation2 + $0x8] sm:$0xff]
        %v671 = vld [vmem:[#allocation2 + $0x10] sm:$0xff]
        %v672 = vld [vmem:[#allocation2 + $0x18] sm:$0xff]
        %v673 = vld [vmem:[#allocation2 + $0x20] sm:$0xff]
        %v674 = vld [vmem:[#allocation2 + $0x28] sm:$0xff]
        %v675 = vld [vmem:[#allocation2 + $0x30] sm:$0xff]
        %v676 = vld [vmem:[#allocation2 + $0x38] sm:$0xff]
        %v677 = vsel %vm633, %v669, 0.0
        %v678 = vsel %vm633, %v670, 0.0
        %v679 = vadd.f32 %v677, %v678
        %v680 = vsel %vm633, %v671, 0.0
        %v681 = vadd.f32 %v679, %v680
        %v682 = vsel %vm633, %v672, 0.0
        %v683 = vadd.f32 %v681, %v682
        %v684 = vsel %vm633, %v673, 0.0
        %v685 = vadd.f32 %v683, %v684
        %v686 = vsel %vm633, %v674, 0.0
        %v687 = vadd.f32 %v685, %v686
        %v688 = vsel %vm633, %v675, 0.0
        %v689 = vadd.f32 %v687, %v688
        %v690 = vsel %vm633, %v676, 0.0
        %v691 = vadd.f32 %v689, %v690
        %692 = vadd.xlane.f32.xlu0 %v691
        %v693 = vpop.xlane.xlu0 %692
        %v694 = vrot.slane %v693, 4
        %v695 = vadd.f32 %v693, %v694
        %v696 = vrot.slane %v695, 2
        %v697 = vadd.f32 %v695, %v696
        %v698 = vrot.slane %v697, 1
        %v699 = vadd.f32 %v697, %v698
        %s700 = vtos %v699
        %v701 = vstv %s700
        %vm702 = vcmask 0
        %703 = vst.msk [vmem:[%s276] sm:$0x1] %vm702, %v701
        %v704 = vld [vmem:[#allocation3] sm:$0xff]
        %v705 = vld [vmem:[#allocation3 + $0x8] sm:$0xff]
        %v706 = vld [vmem:[#allocation3 + $0x10] sm:$0xff]
        %v707 = vld [vmem:[#allocation3 + $0x18] sm:$0xff]
        %v708 = vld [vmem:[#allocation3 + $0x20] sm:$0xff]
        %v709 = vld [vmem:[#allocation3 + $0x28] sm:$0xff]
        %v710 = vld [vmem:[#allocation3 + $0x30] sm:$0xff]
        %v711 = vld [vmem:[#allocation3 + $0x38] sm:$0xff]
        %v712 = vsel %vm633, %v704, 0.0
        %v713 = vsel %vm633, %v705, 0.0
        %v714 = vadd.f32 %v712, %v713
        %v715 = vsel %vm633, %v706, 0.0
        %v716 = vadd.f32 %v714, %v715
        %v717 = vsel %vm633, %v707, 0.0
        %v718 = vadd.f32 %v716, %v717
        %v719 = vsel %vm633, %v708, 0.0
        %v720 = vadd.f32 %v718, %v719
        %v721 = vsel %vm633, %v709, 0.0
        %v722 = vadd.f32 %v720, %v721
        %v723 = vsel %vm633, %v710, 0.0
        %v724 = vadd.f32 %v722, %v723
        %v725 = vsel %vm633, %v711, 0.0
        %v726 = vadd.f32 %v724, %v725
        %727 = vadd.xlane.f32.xlu0 %v726
        %v728 = vpop.xlane.xlu0 %727
        %v729 = vrot.slane %v728, 4
        %v730 = vadd.f32 %v728, %v729
        %v731 = vrot.slane %v730, 2
        %v732 = vadd.f32 %v730, %v731
        %v733 = vrot.slane %v732, 1
        %v734 = vadd.f32 %v732, %v733
        %s735 = vtos %v734
        %v736 = vstv %s735
        %737 = vst.msk [vmem:[%s279] sm:$0x1] %vm702, %v736
      $region44: #{tpu_custom_call.1} parent=35 // pred_fallthru
        _
      %p738 = scmp.lt.s32.totalorder %s21, 1
      %s739 = scalar_select %p738, %s21, 1
      %s740 = scalar_lea.vmem %s4, %s739
      %p741 = scmp.lt.s32.totalorder %s21, 1
      %s742 = scalar_select %p741, %s21, 1
      %s743 = scalar_lea.vmem %s5, %s742
      // Predicated region
      $region45: #{tpu_custom_call.1} parent=35 // pred_check
        %p744 = pneg %p145
      $region46: #{tpu_custom_call.1} parent=35 // pred_check_branch
        %746 = sbr.rel (%p744) target = $region48
      $region47: #{tpu_custom_call.1} parent=35 // pred_region
        _
      $region48: #{tpu_custom_call.1} parent=35 // pred_fallthru
        _
      // Predicated region
      $region49: #{tpu_custom_call.1} parent=35 // pred_check
        %p747 = pneg %p171
      $region50: #{tpu_custom_call.1} parent=35 // pred_check_branch
        %749 = sbr.rel (%p747) target = $region52
      $region51: #{tpu_custom_call.1} parent=35 // pred_region
        _
      $region52: #{tpu_custom_call.1} parent=35 // pred_fallthru
        _
    $region36: #{tpu_custom_call.1} parent=5 // pred_fallthru
      _
    %p750 = scmp.le.s32.totalorder 2, %s12
    // Predicated region
    $region53: #{tpu_custom_call.1} parent=5 // pred_check
      %p751 = pneg %p750
    $region54: #{tpu_custom_call.1} parent=5 // pred_check_branch
      %753 = sbr.rel (%p751) target = $region56
    $region55: #{tpu_custom_call.1} parent=5 // pred_region
      %s754 = ssub.s32 %s12, 2
      // Predicated region
      $region57: #{tpu_custom_call.1} parent=55 // pred_check
        %p755 = pneg %p151
      $region58: #{tpu_custom_call.1} parent=55 // pred_check_branch
        %757 = sbr.rel (%p755) target = $region60
      $region59: #{tpu_custom_call.1} parent=55 // pred_region
        %p758 = scmp.lt.s32.totalorder %s23, 1
        %s759 = scalar_select %p758, %s23, 1
        %s760 = scalar_lea.vmem %s4, %s759
      $region60: #{tpu_custom_call.1} parent=55 // pred_fallthru
        _
      // Predicated region
      $region61: #{tpu_custom_call.1} parent=55 // pred_check
        %p761 = pneg %p177
      $region62: #{tpu_custom_call.1} parent=55 // pred_check_branch
        %763 = sbr.rel (%p761) target = $region64
      $region63: #{tpu_custom_call.1} parent=55 // pred_region
        %p764 = scmp.lt.s32.totalorder %s23, 1
        %s765 = scalar_select %p764, %s23, 1
        %s766 = scalar_lea.vmem %s5, %s765
      $region64: #{tpu_custom_call.1} parent=55 // pred_fallthru
        _
    $region56: #{tpu_custom_call.1} parent=5 // pred_fallthru
      _
  $region6: #{tpu_custom_call.1} parent=0 // loop_footer
    %s16 = sadd.s32 1, %s12
  $region7: #{tpu_custom_call.1} parent=0 // loop_footer_branch
    %11 = sbr.rel target = $region3
  $region8: #{tpu_custom_call.1} parent=0 // loop_exit
    _

</llo_original>
